<compile_context>
chip_gen: v7x
topology: tpu7x:2x2x1
jax: 0.10.0
libtpu: 0.0.40
codegen_flags: <defaults>
</compile_context>

<pallas_src>
import functools
import math

import jax
import jax.numpy as jnp
import numpy as np
from jax import lax
from jax.experimental import pallas as pl
from jax.experimental.pallas import tpu as pltpu


# ---------------------------------------------------------------------------
# Kernel 1: GroupNorm statistics (reduction over sequence tiles)
# ---------------------------------------------------------------------------
def _gn_stats_kernel(x_ref, a_ref, gamma_ref, beta_ref, sc_ref, sh_ref,
                     s1_ref, s2_ref, *, eps):
    t = pl.program_id(1)
    nt = pl.num_programs(1)

    @pl.when(t == 0)
    def _():
        s1_ref[...] = jnp.zeros(s1_ref.shape, s1_ref.dtype)
        s2_ref[...] = jnp.zeros(s2_ref.shape, s2_ref.dtype)

    xf = x_ref[0].astype(jnp.float32)                      # [ts, C]
    s1_ref[...] += jnp.sum(xf, axis=0, keepdims=True)      # [1, C]
    s2_ref[...] += jnp.sum(xf * xf, axis=0, keepdims=True)

    @pl.when(t == nt - 1)
    def _():
        # a_ref[c', c] = 1/(group_size*T) if c' and c share a group, else 0.
        mean = jnp.dot(s1_ref[...], a_ref[...],
                       preferred_element_type=jnp.float32)     # [1, C]
        meansq = jnp.dot(s2_ref[...], a_ref[...],
                         preferred_element_type=jnp.float32)
        rstd = lax.rsqrt(meansq - mean * mean + eps)
        g = gamma_ref[...]
        sc_ref[0] = g * rstd                                   # x*sc + sh == GN(x)
        sh_ref[0] = beta_ref[...] - mean * g * rstd


# ---------------------------------------------------------------------------
# Kernel 2: normalize + QKV projection, head-major q/k/v output layout
# ---------------------------------------------------------------------------
def _norm_qkv_kernel(x_ref, sc_ref, sh_ref, w_ref, b_ref,
                     q_ref, k_ref, v_ref, *, num_heads, head_dim, compute_dtype):
    C = num_heads * head_dim
    xf = x_ref[0].astype(jnp.float32)                      # [ts, C]
    xn = xf * sc_ref[0] + sh_ref[0]                        # GroupNorm (f32)

    # Single lane-dense matmul; bf16 operands, f32 accumulation.
    qkv = jnp.dot(xn.astype(compute_dtype), w_ref[...],
                  preferred_element_type=jnp.float32) + b_ref[...]   # [ts, 3C]
    qkv = qkv.astype(compute_dtype)

    # Columns are ordered [q | k | v], each head-major (reordered host-side).
    # Only cheap static slice + store per head (the matmul is hoisted above).
    for h in range(num_heads):
        lo = h * head_dim
        q_ref[0, h] = qkv[:, lo:lo + head_dim]
        k_ref[0, h] = qkv[:, C + lo:C + lo + head_dim]
        v_ref[0, h] = qkv[:, 2 * C + lo:2 * C + lo + head_dim]


# ---------------------------------------------------------------------------
# Kernel 3: flash attention (online softmax) + proj_out + residual
# ---------------------------------------------------------------------------
def _flash_proj_kernel(q_ref, k_ref, v_ref, wp_ref, bp_ref, x_ref, o_ref,
                       m_ref, l_ref, acc_ref, hp_ref):
    h = pl.program_id(2)
    ki = pl.program_id(3)
    nh = pl.num_programs(2)
    nk = pl.num_programs(3)

    @pl.when(jnp.logical_and(h == 0, ki == 0))
    def _():
        hp_ref[...] = jnp.zeros(hp_ref.shape, hp_ref.dtype)

    @pl.when(ki == 0)
    def _():
        m_ref[...] = jnp.full(m_ref.shape, -jnp.inf, m_ref.dtype)
        l_ref[...] = jnp.zeros(l_ref.shape, l_ref.dtype)
        acc_ref[...] = jnp.zeros(acc_ref.shape, acc_ref.dtype)

    q = q_ref[0, 0]                                        # [tq, ch] (scale folded)
    k = k_ref[0, 0]                                        # [tk, ch]
    v = v_ref[0, 0]                                        # [tk, ch]

    # q @ k^T without materializing a transpose (contract last dims).
    s = lax.dot_general(q, k, (((1,), (1,)), ((), ())),
                        preferred_element_type=jnp.float32)          # [tq, tk]

    m_prev = m_ref[...]
    m_new = jnp.maximum(m_prev, jnp.max(s, axis=-1, keepdims=True))  # [tq, 1]
    alpha = jnp.exp(m_prev - m_new)
    p = jnp.exp(s - m_new)                                           # unnormalized
    l_ref[...] = alpha * l_ref[...] + jnp.sum(p, axis=-1, keepdims=True)
    acc_ref[...] = alpha * acc_ref[...] + jnp.dot(
        p.astype(v.dtype), v, preferred_element_type=jnp.float32)
    m_ref[...] = m_new

    @pl.when(ki == nk - 1)
    def _():
        # Deferred softmax normalization (EUP reciprocal on a free slot), then
        # fold this head directly into proj_out via its [ch, C] weight slab.
        a = acc_ref[...] * pl.reciprocal(l_ref[...], approx=True)    # [tq, ch]
        hp_ref[...] += jnp.dot(a.astype(wp_ref.dtype), wp_ref[0],
                               preferred_element_type=jnp.float32)   # [tq, C]

    @pl.when(jnp.logical_and(h == nh - 1, ki == nk - 1))
    def _():
        o_ref[0] = (x_ref[0].astype(jnp.float32) + hp_ref[...] + bp_ref[...]
                    ).astype(o_ref.dtype)


# ---------------------------------------------------------------------------
# Wrapper
# ---------------------------------------------------------------------------
def _pick_tile(n, candidates=(512, 256, 128, 64, 32, 16, 8)):
    for c in candidates:
        if n % c == 0:
            return c
    return n


def _vmem_limit(*block_nbytes, scratch_nbytes=0):
    # double-buffered pipeline blocks + scratch + headroom, capped below v7x's
    # 64 MiB physical VMEM and floored at a safe default.
    est = 2 * int(sum(block_nbytes)) + int(scratch_nbytes)
    est = int(1.5 * est) + (2 << 20)
    return int(max(min(est, 48 << 20), 16 << 20))


def attention_block_forward(x, params, num_heads, *, compute_dtype=jnp.bfloat16):
    """x: [B, C, *spatial] (NCHW-style).  Returns the same shape.

    Matches AttentionBlock.forward with QKVAttentionLegacy channel ordering.
    GroupNorm statistics / softmax run in f32; matmul operands use
    `compute_dtype` (bf16 by default) with f32 accumulation.
    """
    B, C = x.shape[:2]
    spatial = x.shape[2:]
    T = int(np.prod(spatial))
    assert C % num_heads == 0
    ch = C // num_heads
    num_groups = 32 if C % 32 == 0 else 1
    cg = C // num_groups
    eps = 1e-5
    out_dtype = x.dtype
    cdt = compute_dtype
    csize = jnp.dtype(cdt).itemsize

    # ---- host-side parameter re-layout (free at call time) -----------------
    gamma = params["gamma"].reshape(1, C).astype(jnp.float32)
    beta = params["beta"].reshape(1, C).astype(jnp.float32)

    scale = 1.0 / math.sqrt(math.sqrt(ch))          # applied to q and k (legacy)
    w = params["w_qkv"].reshape(3 * C, C).astype(jnp.float32)
    b = params["b_qkv"].reshape(3 * C).astype(jnp.float32)
    # PyTorch rows are ordered [H, (q,k,v), ch]; reorder to [(q,k,v), H, ch]
    # so q/k/v land in contiguous head-major column slabs.
    w = w.reshape(num_heads, 3, ch, C).transpose(1, 0, 2, 3).reshape(3 * C, C)
    b = b.reshape(num_heads, 3, ch).transpose(1, 0, 2).reshape(3 * C)
    # Fold the q/k attention scale into the projection weights + bias.
    qk_scale = jnp.concatenate([jnp.full((2 * C,), scale, jnp.float32),
                                jnp.ones((C,), jnp.float32)])
    wqkv = (w * qk_scale[:, None]).T.astype(cdt)               # [C, 3C]
    bqkv = (b * qk_scale).reshape(1, 3 * C)                    # f32

    wproj = params["w_proj"].reshape(C, C).astype(jnp.float32)
    wproj_heads = wproj.T.reshape(num_heads, ch, C).astype(cdt)  # [H, ch, C]
    bproj = params["b_proj"].reshape(1, C).astype(jnp.float32)

    # Group-membership averaging matrix (constant, built host-side).
    gid = np.arange(C) // cg
    a_mat = jnp.asarray((gid[:, None] == gid[None, :]).astype(np.float32)
                        / float(cg * T))

    x_tc = jnp.transpose(x.reshape(B, C, T), (0, 2, 1))        # [B, T, C]
    x_isize = jnp.dtype(x_tc.dtype).itemsize

    ts = _pick_tile(T)
    nt = T // ts

    # ---- Kernel 1: GroupNorm statistics ------------------------------------
    sc, sh = pl.pallas_call(
        functools.partial(_gn_stats_kernel, eps=eps),
        out_shape=(jax.ShapeDtypeStruct((B, 1, C), jnp.float32),
                   jax.ShapeDtypeStruct((B, 1, C), jnp.float32)),
        grid_spec=pltpu.PrefetchScalarGridSpec(
            num_scalar_prefetch=0,
            grid=(B, nt),
            in_specs=[
                pl.BlockSpec((1, ts, C), lambda bb, tt: (bb, tt, 0)),
                pl.BlockSpec((C, C), lambda bb, tt: (0, 0)),
                pl.BlockSpec((1, C), lambda bb, tt: (0, 0)),
                pl.BlockSpec((1, C), lambda bb, tt: (0, 0)),
            ],
            out_specs=[
                pl.BlockSpec((1, 1, C), lambda bb, tt: (bb, 0, 0)),
                pl.BlockSpec((1, 1, C), lambda bb, tt: (bb, 0, 0)),
            ],
            scratch_shapes=[pltpu.VMEM((1, C), jnp.float32),
                            pltpu.VMEM((1, C), jnp.float32)],
        ),
        compiler_params=pltpu.CompilerParams(
            dimension_semantics=("parallel", "arbitrary"),
            vmem_limit_bytes=_vmem_limit(ts * C * x_isize, C * C * 4, 4 * C * 4,
                                         scratch_nbytes=2 * C * 4),
        ),
    )(x_tc, a_mat, gamma, beta)

    # ---- Kernel 2: normalize + QKV projection ------------------------------
    q_all, k_all, v_all = pl.pallas_call(
        functools.partial(_norm_qkv_kernel, num_heads=num_heads,
                          head_dim=ch, compute_dtype=cdt),
        out_shape=tuple(jax.ShapeDtypeStruct((B, num_heads, T, ch), cdt)
                        for _ in range(3)),
        grid_spec=pltpu.PrefetchScalarGridSpec(
            num_scalar_prefetch=0,
            grid=(B, nt),
            in_specs=[
                pl.BlockSpec((1, ts, C), lambda bb, tt: (bb, tt, 0)),
                pl.BlockSpec((1, 1, C), lambda bb, tt: (bb, 0, 0)),
                pl.BlockSpec((1, 1, C), lambda bb, tt: (bb, 0, 0)),
                pl.BlockSpec((C, 3 * C), lambda bb, tt: (0, 0)),
                pl.BlockSpec((1, 3 * C), lambda bb, tt: (0, 0)),
            ],
            out_specs=tuple(
                pl.BlockSpec((1, num_heads, ts, ch),
                             lambda bb, tt: (bb, 0, tt, 0))
                for _ in range(3)),
        ),
        compiler_params=pltpu.CompilerParams(
            dimension_semantics=("parallel", "parallel"),
            vmem_limit_bytes=_vmem_limit(
                ts * C * x_isize, 2 * C * 4, 3 * C * C * csize, 3 * C * 4,
                3 * C * ts * csize),
        ),
    )(x_tc, sc, sh, wqkv, bqkv)

    # ---- Kernel 3: flash attention + proj_out + residual -------------------
    tq = _pick_tile(T)
    tk = _pick_tile(T)
    nq, nk = T // tq, T // tk

    out_tc = pl.pallas_call(
        _flash_proj_kernel,
        out_shape=jax.ShapeDtypeStruct((B, T, C), out_dtype),
        grid_spec=pltpu.PrefetchScalarGridSpec(
            num_scalar_prefetch=0,
            grid=(B, nq, num_heads, nk),
            in_specs=[
                pl.BlockSpec((1, 1, tq, ch), lambda bb, qi, hh, kk: (bb, hh, qi, 0)),
                pl.BlockSpec((1, 1, tk, ch), lambda bb, qi, hh, kk: (bb, hh, kk, 0)),
                pl.BlockSpec((1, 1, tk, ch), lambda bb, qi, hh, kk: (bb, hh, kk, 0)),
                pl.BlockSpec((1, ch, C), lambda bb, qi, hh, kk: (hh, 0, 0)),
                pl.BlockSpec((1, C), lambda bb, qi, hh, kk: (0, 0)),
                pl.BlockSpec((1, tq, C), lambda bb, qi, hh, kk: (bb, qi, 0)),
            ],
            out_specs=pl.BlockSpec((1, tq, C), lambda bb, qi, hh, kk: (bb, qi, 0)),
            scratch_shapes=[
                pltpu.VMEM((tq, 1), jnp.float32),      # running max m
                pltpu.VMEM((tq, 1), jnp.float32),      # running denom l
                pltpu.VMEM((tq, ch), jnp.float32),     # per-head pv accumulator
                pltpu.VMEM((tq, C), jnp.float32),      # proj_out accumulator
            ],
        ),
        compiler_params=pltpu.CompilerParams(
            dimension_semantics=("parallel", "parallel", "arbitrary", "arbitrary"),
            vmem_limit_bytes=_vmem_limit(
                tq * ch * csize, 2 * tk * ch * csize, ch * C * csize, C * 4,
                tq * C * x_isize, tq * C * jnp.dtype(out_dtype).itemsize,
                scratch_nbytes=(2 * tq + tq * ch + tq * C) * 4),
        ),
    )(q_all, k_all, v_all, wproj_heads, bproj, x_tc)

    return jnp.transpose(out_tc, (0, 2, 1)).reshape(B, C, *spatial)


# ---------------------------------------------------------------------------
# Pure-JAX reference (mirrors the PyTorch module, f32 throughout)
# ---------------------------------------------------------------------------
def _reference_forward(x, params, num_heads):
    B, C = x.shape[:2]
    T = int(np.prod(x.shape[2:]))
    num_groups = 32 if C % 32 == 0 else 1
    xr = x.reshape(B, C, T).astype(jnp.float32)

    xg = xr.reshape(B, num_groups, C // num_groups, T)
    mean = jnp.mean(xg, axis=(2, 3), keepdims=True)
    var = jnp.mean((xg - mean) ** 2, axis=(2, 3), keepdims=True)
    xn = ((xg - mean) / jnp.sqrt(var + 1e-5)).reshape(B, C, T)
    xn = xn * params["gamma"].reshape(1, C, 1) + params["beta"].reshape(1, C, 1)

    wqkv = params["w_qkv"].reshape(3 * C, C)
    qkv = jnp.einsum("oc,bct->bot", wqkv, xn) + params["b_qkv"].reshape(1, 3 * C, 1)

    ch = C // num_heads
    qkv = qkv.reshape(B * num_heads, 3 * ch, T)
    q, k, v = qkv[:, :ch], qkv[:, ch:2 * ch], qkv[:, 2 * ch:]
    scale = 1.0 / math.sqrt(math.sqrt(ch))
    w = jnp.einsum("bct,bcs->bts", q * scale, k * scale)
    w = jax.nn.softmax(w, axis=-1)
    a = jnp.einsum("bts,bcs->bct", w, v).reshape(B, C, T)

    wproj = params["w_proj"].reshape(C, C)
    hproj = jnp.einsum("oc,bct->bot", wproj, a) + params["b_proj"].reshape(1, C, 1)
    return (xr + hproj).reshape(x.shape)


# ---------------------------------------------------------------------------
if __name__ == "__main__":
    configs = [
        # (B, C, H, W, heads):  C=8  -> 1 group, ch=4,  T=256 (2 seq/kv tiles)
        #                       C=32 -> 32 groups, ch=8, T=64  (single tile)
        (2, 8, 16, 16, 2),
        (2, 32, 8, 8, 4),
    ]
    key = jax.random.PRNGKey(0)
    for (B, C, H, W, heads) in configs:
        key, k_x, k_g, k_b, k_wq, k_bq, k_wp, k_bp = jax.random.split(key, 8)
        x = jax.random.normal(k_x, (B, C, H, W), dtype=jnp.float32)
        params = {
            "gamma": 1.0 + 0.1 * jax.random.normal(k_g, (C,), jnp.float32),
            "beta": 0.1 * jax.random.normal(k_b, (C,), jnp.float32),
            "w_qkv": 0.2 * jax.random.normal(k_wq, (3 * C, C, 1), jnp.float32),
            "b_qkv": 0.1 * jax.random.normal(k_bq, (3 * C,), jnp.float32),
            # NOTE: the real module zero-inits proj_out (zero_module); nonzero
            # weights are used here so the attention/proj path is validated.
            "w_proj": 0.1 * jax.random.normal(k_wp, (C, C, 1), jnp.float32),
            "b_proj": 0.05 * jax.random.normal(k_bp, (C,), jnp.float32),
        }
        ref = _reference_forward(x, params, heads)

        out_bf16 = jax.block_until_ready(
            attention_block_forward(x, params, heads,
                                    compute_dtype=jnp.bfloat16))
        assert out_bf16.shape == x.shape
        assert jnp.allclose(out_bf16, ref, atol=5e-2, rtol=5e-2), \
            f"bf16 mismatch vs reference (C={C})"

        out_f32 = jax.block_until_ready(
            attention_block_forward(x, params, heads,
                                    compute_dtype=jnp.float32))
        assert jnp.allclose(out_f32, ref, atol=1e-2, rtol=1e-2), \
            f"f32 mismatch vs reference (C={C})"

    print("KERNEL_OK")
</pallas_src>

<mosaic_0001>
module attributes {stable_mosaic.version = 11 : i64} {
  func.func @_gn_stats_kernel(%arg0: i32, %arg1: i32, %arg2: memref<1x256x8xf32, #tpu.memory_space<vmem>>, %arg3: memref<8x8xf32, #tpu.memory_space<vmem>>, %arg4: memref<1x8xf32, #tpu.memory_space<vmem>>, %arg5: memref<1x8xf32, #tpu.memory_space<vmem>>, %arg6: memref<1x1x8xf32, #tpu.memory_space<vmem>>, %arg7: memref<1x1x8xf32, #tpu.memory_space<vmem>>, %arg8: memref<1x8xf32, #tpu.memory_space<vmem>>, %arg9: memref<1x8xf32, #tpu.memory_space<vmem>>) attributes {dimension_semantics = [#tpu.dimension_semantics<parallel>, #tpu.dimension_semantics<arbitrary>], iteration_bounds = array<i64: 2, 1>, scalar_prefetch = 0 : i64, scratch_operands = 2 : i64, tpu.core_type = #tpu.core_type<tc>, window_params = [{transform_indices = @transform_0, window_bounds = array<i64: 1, 256, 8>}, {pipeline_mode = #tpu.pipeline_mode<synchronous>, transform_indices = @transform_1, window_bounds = array<i64: 8, 8>}, {pipeline_mode = #tpu.pipeline_mode<synchronous>, transform_indices = @transform_2, window_bounds = array<i64: 1, 8>}, {pipeline_mode = #tpu.pipeline_mode<synchronous>, transform_indices = @transform_3, window_bounds = array<i64: 1, 8>}, {transform_indices = @transform_4, window_bounds = array<i64: 1, 1, 8>}, {transform_indices = @transform_5, window_bounds = array<i64: 1, 1, 8>}]} {
    %c0_i32 = arith.constant 0 : i32
    %0 = arith.cmpi eq, %arg1, %c0_i32 : i32
    %1 = arith.extui %0 : i1 to i32
    %c0_i32_0 = arith.constant 0 : i32
    %2 = arith.cmpi ne, %1, %c0_i32_0 : i32
    scf.if %2 {
      %cst_14 = arith.constant 0.000000e+00 : f32
      %19 = vector.broadcast %cst_14 : f32 to vector<1x8xf32>
      %c0_15 = arith.constant 0 : index
      %c0_16 = arith.constant 0 : index
      %20 = vector.load %arg8[%c0_15, %c0_16] : memref<1x8xf32, #tpu.memory_space<vmem>>, vector<1x8xf32>
      tpu.vector_store %arg8[%c0_15, %c0_16], %19 {strides = array<i32>} : memref<1x8xf32, #tpu.memory_space<vmem>>, vector<1x8xf32>,
      %cst_17 = arith.constant 0.000000e+00 : f32
      %21 = vector.broadcast %cst_17 : f32 to vector<1x8xf32>
      %c0_18 = arith.constant 0 : index
      %c0_19 = arith.constant 0 : index
      %22 = vector.load %arg9[%c0_18, %c0_19] : memref<1x8xf32, #tpu.memory_space<vmem>>, vector<1x8xf32>
      tpu.vector_store %arg9[%c0_18, %c0_19], %21 {strides = array<i32>} : memref<1x8xf32, #tpu.memory_space<vmem>>, vector<1x8xf32>,
    } else {
    }
    %c0 = arith.constant 0 : index
    %c0_1 = arith.constant 0 : index
    %c0_2 = arith.constant 0 : index
    %3 = vector.load %arg2[%c0, %c0_1, %c0_2] : memref<1x256x8xf32, #tpu.memory_space<vmem>>, vector<1x256x8xf32>
    %4 = vector.shape_cast %3 : vector<1x256x8xf32> to vector<256x8xf32>
    %c0_3 = arith.constant 0 : index
    %c0_4 = arith.constant 0 : index
    %5 = vector.load %arg8[%c0_3, %c0_4] : memref<1x8xf32, #tpu.memory_space<vmem>>, vector<1x8xf32>
    %cst = arith.constant dense<0.000000e+00> : vector<8xf32>
    %6 = vector.multi_reduction <add>, %4, %cst [0] : vector<256x8xf32> to vector<8xf32>
    %7 = vector.shape_cast %6 : vector<8xf32> to vector<1x8xf32>
    %8 = arith.addf %5, %7 : vector<1x8xf32>
    %c0_5 = arith.constant 0 : index
    %c0_6 = arith.constant 0 : index
    %9 = vector.load %arg8[%c0_5, %c0_6] : memref<1x8xf32, #tpu.memory_space<vmem>>, vector<1x8xf32>
    tpu.vector_store %arg8[%c0_5, %c0_6], %8 {strides = array<i32>} : memref<1x8xf32, #tpu.memory_space<vmem>>, vector<1x8xf32>,
    %c0_7 = arith.constant 0 : index
    %c0_8 = arith.constant 0 : index
    %10 = vector.load %arg9[%c0_7, %c0_8] : memref<1x8xf32, #tpu.memory_space<vmem>>, vector<1x8xf32>
    %11 = arith.mulf %4, %4 : vector<256x8xf32>
    %cst_9 = arith.constant dense<0.000000e+00> : vector<8xf32>
    %12 = vector.multi_reduction <add>, %11, %cst_9 [0] : vector<256x8xf32> to vector<8xf32>
    %13 = vector.shape_cast %12 : vector<8xf32> to vector<1x8xf32>
    %14 = arith.addf %10, %13 : vector<1x8xf32>
    %c0_10 = arith.constant 0 : index
    %c0_11 = arith.constant 0 : index
    %15 = vector.load %arg9[%c0_10, %c0_11] : memref<1x8xf32, #tpu.memory_space<vmem>>, vector<1x8xf32>
    tpu.vector_store %arg9[%c0_10, %c0_11], %14 {strides = array<i32>} : memref<1x8xf32, #tpu.memory_space<vmem>>, vector<1x8xf32>,
    %c0_i32_12 = arith.constant 0 : i32
    %16 = arith.cmpi eq, %arg1, %c0_i32_12 : i32
    %17 = arith.extui %16 : i1 to i32
    %c0_i32_13 = arith.constant 0 : i32
    %18 = arith.cmpi ne, %17, %c0_i32_13 : i32
    scf.if %18 {
      %c0_14 = arith.constant 0 : index
      %c0_15 = arith.constant 0 : index
      %19 = vector.load %arg8[%c0_14, %c0_15] : memref<1x8xf32, #tpu.memory_space<vmem>>, vector<1x8xf32>
      %c0_16 = arith.constant 0 : index
      %c0_17 = arith.constant 0 : index
      %20 = vector.load %arg3[%c0_16, %c0_17] : memref<8x8xf32, #tpu.memory_space<vmem>>, vector<8x8xf32>
      %cst_18 = arith.constant dense<0.000000e+00> : vector<1x8xf32>
      %21 = tpu.matmul %19, %20, %cst_18 {dimension_numbers = #tpu.dot_dimension_numbers<[1], [0], [0], [1], [0, 0, 1, 1], [], []>} : vector<1x8xf32>, vector<8x8xf32>, vector<1x8xf32> -> vector<1x8xf32>
      %c0_19 = arith.constant 0 : index
      %c0_20 = arith.constant 0 : index
      %22 = vector.load %arg9[%c0_19, %c0_20] : memref<1x8xf32, #tpu.memory_space<vmem>>, vector<1x8xf32>
      %c0_21 = arith.constant 0 : index
      %c0_22 = arith.constant 0 : index
      %23 = vector.load %arg3[%c0_21, %c0_22] : memref<8x8xf32, #tpu.memory_space<vmem>>, vector<8x8xf32>
      %cst_23 = arith.constant dense<0.000000e+00> : vector<1x8xf32>
      %24 = tpu.matmul %22, %23, %cst_23 {dimension_numbers = #tpu.dot_dimension_numbers<[1], [0], [0], [1], [0, 0, 1, 1], [], []>} : vector<1x8xf32>, vector<8x8xf32>, vector<1x8xf32> -> vector<1x8xf32>
      %25 = arith.mulf %21, %21 : vector<1x8xf32>
      %26 = arith.subf %24, %25 : vector<1x8xf32>
      %cst_24 = arith.constant 9.99999974E-6 : f32
      %27 = vector.broadcast %cst_24 : f32 to vector<1x8xf32>
      %28 = arith.addf %26, %27 : vector<1x8xf32>
      %29 = math.rsqrt %28 : vector<1x8xf32>
      %c0_25 = arith.constant 0 : index
      %c0_26 = arith.constant 0 : index
      %30 = vector.load %arg4[%c0_25, %c0_26] : memref<1x8xf32, #tpu.memory_space<vmem>>, vector<1x8xf32>
      %31 = arith.mulf %30, %29 : vector<1x8xf32>
      %c0_27 = arith.constant 0 : index
      %c0_28 = arith.constant 0 : index
      %c0_29 = arith.constant 0 : index
      %32 = vector.load %arg6[%c0_27, %c0_28, %c0_29] : memref<1x1x8xf32, #tpu.memory_space<vmem>>, vector<1x1x8xf32>
      %33 = vector.shape_cast %32 : vector<1x1x8xf32> to vector<1x8xf32>
      %34 = vector.shape_cast %31 : vector<1x8xf32> to vector<1x1x8xf32>
      tpu.vector_store %arg6[%c0_27, %c0_28, %c0_29], %34 {strides = array<i32>} : memref<1x1x8xf32, #tpu.memory_space<vmem>>, vector<1x1x8xf32>,
      %c0_30 = arith.constant 0 : index
      %c0_31 = arith.constant 0 : index
      %35 = vector.load %arg5[%c0_30, %c0_31] : memref<1x8xf32, #tpu.memory_space<vmem>>, vector<1x8xf32>
      %36 = arith.mulf %21, %30 : vector<1x8xf32>
      %37 = arith.mulf %36, %29 : vector<1x8xf32>
      %38 = arith.subf %35, %37 : vector<1x8xf32>
      %c0_32 = arith.constant 0 : index
      %c0_33 = arith.constant 0 : index
      %c0_34 = arith.constant 0 : index
      %39 = vector.load %arg7[%c0_32, %c0_33, %c0_34] : memref<1x1x8xf32, #tpu.memory_space<vmem>>, vector<1x1x8xf32>
      %40 = vector.shape_cast %39 : vector<1x1x8xf32> to vector<1x8xf32>
      %41 = vector.shape_cast %38 : vector<1x8xf32> to vector<1x1x8xf32>
      tpu.vector_store %arg7[%c0_32, %c0_33, %c0_34], %41 {strides = array<i32>} : memref<1x1x8xf32, #tpu.memory_space<vmem>>, vector<1x1x8xf32>,
    } else {
    }
    return
  }
  func.func @transform_0(%arg0: i32, %arg1: i32) -> (i32, i32, i32) {
    %c0_i32 = arith.constant 0 : i32
    %c0_i32_0 = arith.constant 0 : i32
    return %arg0, %arg1, %c0_i32 : i32, i32, i32
  }
  func.func @transform_1(%arg0: i32, %arg1: i32) -> (i32, i32) {
    %c0_i32 = arith.constant 0 : i32
    %c0_i32_0 = arith.constant 0 : i32
    %c0_i32_1 = arith.constant 0 : i32
    return %c0_i32, %c0_i32_0 : i32, i32
  }
  func.func @transform_2(%arg0: i32, %arg1: i32) -> (i32, i32) {
    %c0_i32 = arith.constant 0 : i32
    %c0_i32_0 = arith.constant 0 : i32
    %c0_i32_1 = arith.constant 0 : i32
    return %c0_i32, %c0_i32_0 : i32, i32
  }
  func.func @transform_3(%arg0: i32, %arg1: i32) -> (i32, i32) {
    %c0_i32 = arith.constant 0 : i32
    %c0_i32_0 = arith.constant 0 : i32
    %c0_i32_1 = arith.constant 0 : i32
    return %c0_i32, %c0_i32_0 : i32, i32
  }
  func.func @transform_4(%arg0: i32, %arg1: i32) -> (i32, i32, i32) {
    %c0_i32 = arith.constant 0 : i32
    %c0_i32_0 = arith.constant 0 : i32
    %c0_i32_1 = arith.constant 0 : i32
    return %arg0, %c0_i32, %c0_i32_0 : i32, i32, i32
  }
  func.func @transform_5(%arg0: i32, %arg1: i32) -> (i32, i32, i32) {
    %c0_i32 = arith.constant 0 : i32
    %c0_i32_0 = arith.constant 0 : i32
    %c0_i32_1 = arith.constant 0 : i32
    return %arg0, %c0_i32, %c0_i32_0 : i32, i32, i32
  }
}

</mosaic_0001>

<llo_original>
// kernel: tpu_custom_call.1
$region0: #{tpu_custom_call.1}
  #allocation0 [shape = 'u32[]', space=smem, size = 0x4, offset = 0x4, fixed_abs, tag = 'smem constant byte address 0x4 - core index']
  #allocation1 [shape = 'u32[144,128]{1,0:T(1,128)}', space=vmem, size = 0x12000, scoped, tag = 'internal scratch']
  #allocation2 [shape = 'f32[1,8]{1,0:T(1,128)}', space=vmem, size = 0x200, scoped, tag = 'scratch operand']
  #allocation3 [shape = 'f32[1,8]{1,0:T(1,128)}', space=vmem, size = 0x200, scoped, tag = 'scratch operand']
  %s0 = inlined_call_operand.vmem [shape: f32[2,256,8], index: 0, kind: input, shape index: {}]
  %s1 = inlined_call_operand.vmem [shape: f32[8,8], index: 1, kind: input, shape index: {}]
  %s2 = inlined_call_operand.vmem [shape: f32[1,8], index: 2, kind: input, shape index: {}]
  %s3 = inlined_call_operand.vmem [shape: f32[1,8], index: 3, kind: input, shape index: {}]
  %s4 = inlined_call_operand.hbm [shape: f32[2,1,8], index: 4, kind: output, shape index: {0}]
  %s5 = inlined_call_operand.hbm [shape: f32[2,1,8], index: 5, kind: output, shape index: {1}]
  %6 = xla_tuple %s4, %s5
  %s7 = sld [smem:[#allocation0]]
  $region65: #{tpu_custom_call.1} parent=0
    _
  %s9 = ssub.s32 1, %s7
  %s10 = scalar_select 0, %s9, %s7
  $region1: #{tpu_custom_call.1} parent=0
    #allocation4 [shape = 'u8[1024]{0}', space=vmem, size = 0x400, scoped, tag = 'output window, operand 0']
    #allocation5 [shape = 's32[2]{0}', space=sflag, size = 0x8, scoped, tag = 'scoped memory for tpu_custom_call.1']
    #allocation6 [shape = 'u8[1024]{0}', space=vmem, size = 0x400, scoped, tag = 'output window, operand 1']
    #allocation7 [shape = 's32[2]{0}', space=sflag, size = 0x8, scoped, tag = 'scoped memory for tpu_custom_call.1']
    %11 = vsyncpa [#allocation5], 0
    %s12 = scalar_lea.sflag [#allocation5], 1
    %13 = vsyncpa %s12, 0
    %14 = vsyncpa [#allocation7], 0
    %s15 = scalar_lea.sflag [#allocation7], 1
    %16 = vsyncpa %s15, 0
    loop: start=0, step=1, limit=4
    $region2: #{tpu_custom_call.1} parent=1 // loop_pre_header
      _
    $region3: #{tpu_custom_call.1} parent=1 // loop_header
      %s18 = sphi 0, %s22
      %p19 = scmp.ge.s32.totalorder %s18, 4
      %s25 = sphi 0, %s37
      %s26 = sphi 0, %s33
      %s27 = sphi 0, %s25
      %s28 = sphi 0, %s26
      %s29 = sphi 0, %s27
      %s30 = sphi 0, %s28
      %s42 = sphi 0, %s44
      %s45 = sphi 0, %s42
      %s46 = sphi 0, %s45
      %s62 = sphi 0, %s46
      %s66 = sphi 0, %s66
      %s68 = sphi 0, %s66
      %s69 = sphi 0, %s68
      %s83 = sphi 0, %s69
      %s87 = sphi 0, %s87
      %s89 = sphi 0, %s87
      %s90 = sphi 0, %s89
      %s104 = sphi 0, %s90
      %s108 = sphi 0, %s108
      %s110 = sphi 0, %s108
      %s111 = sphi 0, %s110
      %s125 = sphi 0, %s111
      %s131 = sphi 0, %s133
      %s134 = sphi 0, %s131
      %s135 = sphi 0, %s134
      %s151 = sphi 0, %s135
      %s157 = sphi 0, %s159
      %s160 = sphi 0, %s157
      %s161 = sphi 0, %s160
      %s177 = sphi 0, %s161
    $region4: #{tpu_custom_call.1} parent=1 // loop_header_branch
      %21 = sbr.rel (%p19) target = $region8
    $region5: #{tpu_custom_call.1} parent=1 // loop_body
      %s23 = ssub.s32 %s18, 1
      %s24 = ssub.s32 %s18, 2
      %s31 = sadd.s32 1, %s26
      %p32 = scmp.ge.s32.totalorder %s31, 1
      %s33 = scalar_select %p32, 0, %s31
      %s34 = sadd.s32 1, %s25
      %s35 = scalar_select %p32, %s34, %s25
      %p36 = scmp.ge.s32.totalorder %s35, 2
      %s37 = scalar_select %p36, 0, %s35
      %s38 = ssub.s32 %s25, %s37
      %s39 = ssub.s32 %s26, %s33
      %s40 = sor.u32 %s38, %s39
      %p41 = scmp.eq.s32.totalorder %s40, 0
      %s43 = sadd.s32 %s42, 1
      %s44 = scalar_select %p41, %s42, %s43
      %p47 = pneg %p41
      %p48 = scmp.eq.s32.totalorder %s18, 1
      %p49 = por %p47, %p48
      %p50 = scmp.ne.s32.totalorder %s42, %s45
      %p51 = scmp.eq.s32.totalorder %s18, 0
      %p52 = por %p50, %p51
      %p53 = scmp.ne.s32.totalorder %s42, %s45
      %p54 = scmp.eq.s32.totalorder %s23, 1
      %p55 = por %p53, %p54
      %p56 = scmp.ne.s32.totalorder %s45, %s46
      %p57 = scmp.eq.s32.totalorder %s23, 0
      %p58 = por %p56, %p57
      %p59 = scmp.ne.s32.totalorder %s45, %s46
      %p60 = scmp.eq.s32.totalorder %s24, 1
      %p61 = por %p59, %p60
      %p63 = scmp.ne.s32.totalorder %s46, %s62
      %p64 = scmp.eq.s32.totalorder %s24, 0
      %p65 = por %p63, %p64
      %s67 = sadd.s32 %s66, 1
      %p70 = scmp.eq.s32.totalorder %s18, 1
      %p71 = scmp.ne.s32.totalorder %s66, %s68
      %p72 = scmp.eq.s32.totalorder %s18, 0
      %p73 = por %p71, %p72
      %p74 = scmp.ne.s32.totalorder %s66, %s68
      %p75 = scmp.eq.s32.totalorder %s23, 1
      %p76 = por %p74, %p75
      %p77 = scmp.ne.s32.totalorder %s68, %s69
      %p78 = scmp.eq.s32.totalorder %s23, 0
      %p79 = por %p77, %p78
      %p80 = scmp.ne.s32.totalorder %s68, %s69
      %p81 = scmp.eq.s32.totalorder %s24, 1
      %p82 = por %p80, %p81
      %p84 = scmp.ne.s32.totalorder %s69, %s83
      %p85 = scmp.eq.s32.totalorder %s24, 0
      %p86 = por %p84, %p85
      %s88 = sadd.s32 %s87, 1
      %p91 = scmp.eq.s32.totalorder %s18, 1
      %p92 = scmp.ne.s32.totalorder %s87, %s89
      %p93 = scmp.eq.s32.totalorder %s18, 0
      %p94 = por %p92, %p93
      %p95 = scmp.ne.s32.totalorder %s87, %s89
      %p96 = scmp.eq.s32.totalorder %s23, 1
      %p97 = por %p95, %p96
      %p98 = scmp.ne.s32.totalorder %s89, %s90
      %p99 = scmp.eq.s32.totalorder %s23, 0
      %p100 = por %p98, %p99
      %p101 = scmp.ne.s32.totalorder %s89, %s90
      %p102 = scmp.eq.s32.totalorder %s24, 1
      %p103 = por %p101, %p102
      %p105 = scmp.ne.s32.totalorder %s90, %s104
      %p106 = scmp.eq.s32.totalorder %s24, 0
      %p107 = por %p105, %p106
      %s109 = sadd.s32 %s108, 1
      %p112 = scmp.eq.s32.totalorder %s18, 1
      %p113 = scmp.ne.s32.totalorder %s108, %s110
      %p114 = scmp.eq.s32.totalorder %s18, 0
      %p115 = por %p113, %p114
      %p116 = scmp.ne.s32.totalorder %s108, %s110
      %p117 = scmp.eq.s32.totalorder %s23, 1
      %p118 = por %p116, %p117
      %p119 = scmp.ne.s32.totalorder %s110, %s111
      %p120 = scmp.eq.s32.totalorder %s23, 0
      %p121 = por %p119, %p120
      %p122 = scmp.ne.s32.totalorder %s110, %s111
      %p123 = scmp.eq.s32.totalorder %s24, 1
      %p124 = por %p122, %p123
      %p126 = scmp.ne.s32.totalorder %s111, %s125
      %p127 = scmp.eq.s32.totalorder %s24, 0
      %p128 = por %p126, %p127
      %s129 = ssub.s32 %s25, %s37
      %p130 = scmp.eq.s32.totalorder %s129, 0
      %s132 = sadd.s32 %s131, 1
      %s133 = scalar_select %p130, %s131, %s132
      %p136 = pneg %p130
      %p137 = scmp.eq.s32.totalorder %s18, 1
      %p138 = por %p136, %p137
      %p139 = scmp.ne.s32.totalorder %s131, %s134
      %p140 = scmp.eq.s32.totalorder %s18, 0
      %p141 = por %p139, %p140
      %p142 = scmp.ne.s32.totalorder %s131, %s134
      %p143 = scmp.eq.s32.totalorder %s23, 1
      %p144 = por %p142, %p143
      %p145 = scmp.ne.s32.totalorder %s134, %s135
      %p146 = scmp.eq.s32.totalorder %s23, 0
      %p147 = por %p145, %p146
      %p148 = scmp.ne.s32.totalorder %s134, %s135
      %p149 = scmp.eq.s32.totalorder %s24, 1
      %p150 = por %p148, %p149
      %p152 = scmp.ne.s32.totalorder %s135, %s151
      %p153 = scmp.eq.s32.totalorder %s24, 0
      %p154 = por %p152, %p153
      %s155 = ssub.s32 %s25, %s37
      %p156 = scmp.eq.s32.totalorder %s155, 0
      %s158 = sadd.s32 %s157, 1
      %s159 = scalar_select %p156, %s157, %s158
      %p162 = pneg %p156
      %p163 = scmp.eq.s32.totalorder %s18, 1
      %p164 = por %p162, %p163
      %p165 = scmp.ne.s32.totalorder %s157, %s160
      %p166 = scmp.eq.s32.totalorder %s18, 0
      %p167 = por %p165, %p166
      %p168 = scmp.ne.s32.totalorder %s157, %s160
      %p169 = scmp.eq.s32.totalorder %s23, 1
      %p170 = por %p168, %p169
      %p171 = scmp.ne.s32.totalorder %s160, %s161
      %p172 = scmp.eq.s32.totalorder %s23, 0
      %p173 = por %p171, %p172
      %p174 = scmp.ne.s32.totalorder %s160, %s161
      %p175 = scmp.eq.s32.totalorder %s24, 1
      %p176 = por %p174, %p175
      %p178 = scmp.ne.s32.totalorder %s161, %s177
      %p179 = scmp.eq.s32.totalorder %s24, 0
      %p180 = por %p178, %p179
      %p181 = scmp.le.s32.totalorder 1, %s18
      %p182 = scmp.lt.s32.totalorder %s18, 3
      %p183 = pnand %p181, %p182
      %p184 = pneg %p183
      // Predicated region
      $region9: #{tpu_custom_call.1} parent=5 // pred_check
        _
      $region10: #{tpu_custom_call.1} parent=5 // pred_check_branch
        %186 = sbr.rel (%p183) target = $region12
      $region11: #{tpu_custom_call.1} parent=5 // pred_region
        %s187 = ssub.s32 %s18, 1
        // Predicated region
        $region13: #{tpu_custom_call.1} parent=11 // pred_check
          %p188 = pneg %p79
        $region14: #{tpu_custom_call.1} parent=11 // pred_check_branch
          %190 = sbr.rel (%p188) target = $region16
        $region15: #{tpu_custom_call.1} parent=11 // pred_region
          _
        $region16: #{tpu_custom_call.1} parent=11 // pred_fallthru
          _
        // Predicated region
        $region17: #{tpu_custom_call.1} parent=11 // pred_check
          %p191 = pneg %p100
        $region18: #{tpu_custom_call.1} parent=11 // pred_check_branch
          %193 = sbr.rel (%p191) target = $region20
        $region19: #{tpu_custom_call.1} parent=11 // pred_region
          _
        $region20: #{tpu_custom_call.1} parent=11 // pred_fallthru
          _
        // Predicated region
        $region21: #{tpu_custom_call.1} parent=11 // pred_check
          %p194 = pneg %p121
        $region22: #{tpu_custom_call.1} parent=11 // pred_check_branch
          %196 = sbr.rel (%p194) target = $region24
        $region23: #{tpu_custom_call.1} parent=11 // pred_region
          _
        $region24: #{tpu_custom_call.1} parent=11 // pred_fallthru
          _
      $region12: #{tpu_custom_call.1} parent=5 // pred_fallthru
        _
      %p197 = scmp.lt.s32.totalorder %s18, 2
      // Predicated region
      $region25: #{tpu_custom_call.1} parent=5 // pred_check
        %p198 = pneg %p197
      $region26: #{tpu_custom_call.1} parent=5 // pred_check_branch
        %200 = sbr.rel (%p198) target = $region28
      $region27: #{tpu_custom_call.1} parent=5 // pred_region
        // Predicated region
        $region29: #{tpu_custom_call.1} parent=27 // pred_check
          %p201 = pneg %p52
        $region30: #{tpu_custom_call.1} parent=27 // pred_check_branch
          %203 = sbr.rel (%p201) target = $region32
        $region31: #{tpu_custom_call.1} parent=27 // pred_region
          %s204 = smul.u32 32, %s26
          %p205 = scmp.lt.s32.totalorder %s25, 1
          %s206 = scalar_select %p205, %s25, 1
          %p207 = scmp.lt.s32.totalorder %s204, 31
          %s208 = scalar_select %p207, %s204, 31
          %s209 = smul.addr %s206, 32
          %s210 = sadd.s32 %s208, %s209
          %s211 = smul.addr %s210, 8
          %s212 = scalar_lea.vmem %s0, %s211
          %s213 = smul.u32 32, %s26
        $region32: #{tpu_custom_call.1} parent=27 // pred_fallthru
          _
      $region28: #{tpu_custom_call.1} parent=5 // pred_fallthru
        _
      %p214 = scmp.le.s32.totalorder 1, %s18
      %p215 = scmp.lt.s32.totalorder %s18, 3
      %p216 = pnand %p214, %p215
      %p217 = pneg %p216
      // Predicated region
      $region33: #{tpu_custom_call.1} parent=5 // pred_check
        _
      $region34: #{tpu_custom_call.1} parent=5 // pred_check_branch
        %219 = sbr.rel (%p216) target = $region36
      $region35: #{tpu_custom_call.1} parent=5 // pred_region
        %s220 = ssub.s32 %s18, 1
        %s221 = smul.u32 32, %s28
        %p222 = scmp.lt.s32.totalorder %s27, 1
        %s223 = scalar_select %p222, %s27, 1
        %p224 = scmp.lt.s32.totalorder %s221, 31
        %s225 = scalar_select %p224, %s221, 31
        %s226 = smul.addr %s223, 32
        %s227 = sadd.s32 %s225, %s226
        %s228 = smul.addr %s227, 8
        %s229 = scalar_lea.vmem %s0, %s228
        %p230 = pneg %p58
        %p231 = pneg %p55
        %p232 = pneg %p79
        %p233 = pneg %p76
        %p234 = pneg %p100
        %p235 = pneg %p97
        %p236 = pneg %p121
        %p237 = pneg %p118
        %p238 = pneg %p147
        %p239 = pneg %p144
        %s240 = sand.u32 %s134, 1
        %s241 = scalar_lea.sflag [#allocation5], %s240
        %s242 = sand.u32 %s134, 1
        %s243 = scalar_lea.vmem [#allocation4], %s242
        %p244 = pneg %p173
        %p245 = pneg %p170
        %s246 = sand.u32 %s160, 1
        %s247 = scalar_lea.sflag [#allocation7], %s246
        %s248 = sand.u32 %s160, 1
        %s249 = scalar_lea.vmem [#allocation6], %s248
        %s250 = smul.u32 32, %s28
        %p251 = scmp.lt.s32.totalorder %s27, 1
        %s252 = scalar_select %p251, %s27, 1
        %p253 = scmp.lt.s32.totalorder %s250, 31
        %s254 = scalar_select %p253, %s250, 31
        %s255 = smul.addr %s252, 32
        %s256 = sadd.s32 %s254, %s255
        %s257 = smul.addr %s256, 8
        %s258 = scalar_lea.vmem %s0, %s257
        %s259 = smul.u32 32, %s28
        %p260 = scmp.eq.s32.totalorder %s28, 0
        // Predicated region
        $region37: #{tpu_custom_call.1} parent=35 // pred_check
          %p261 = pneg %p260
        $region38: #{tpu_custom_call.1} parent=35 // pred_check_branch
          %263 = sbr.rel (%p261) target = $region40
        $region39: #{tpu_custom_call.1} parent=35 // pred_region
          %vm264 = vcmask 57344
          %265 = vst.msk [vmem:[#allocation2] sm:$0x1] %vm264, 0.0
          %266 = vst.msk [vmem:[#allocation3] sm:$0x1] %vm264, 0.0
        $region40: #{tpu_custom_call.1} parent=35 // pred_fallthru
          _
        %v267 = vld [vmem:[%s258] sm:$0xff]
        %v268 = vld [vmem:[%s258 + $0x8] sm:$0xff]
        %v269 = vld [vmem:[%s258 + $0x10] sm:$0xff]
        %v270 = vld [vmem:[%s258 + $0x18] sm:$0xff]
        %v271 = vld [vmem:[%s258 + $0x20] sm:$0xff]
        %v272 = vld [vmem:[%s258 + $0x28] sm:$0xff]
        %v273 = vld [vmem:[%s258 + $0x30] sm:$0xff]
        %v274 = vld [vmem:[%s258 + $0x38] sm:$0xff]
        %v275 = vld [vmem:[%s258 + $0x40] sm:$0xff]
        %v276 = vld [vmem:[%s258 + $0x48] sm:$0xff]
        %v277 = vld [vmem:[%s258 + $0x50] sm:$0xff]
        %v278 = vld [vmem:[%s258 + $0x58] sm:$0xff]
        %v279 = vld [vmem:[%s258 + $0x60] sm:$0xff]
        %v280 = vld [vmem:[%s258 + $0x68] sm:$0xff]
        %v281 = vld [vmem:[%s258 + $0x70] sm:$0xff]
        %v282 = vld [vmem:[%s258 + $0x78] sm:$0xff]
        %v283 = vld [vmem:[%s258 + $0x80] sm:$0xff]
        %v284 = vld [vmem:[%s258 + $0x88] sm:$0xff]
        %v285 = vld [vmem:[%s258 + $0x90] sm:$0xff]
        %v286 = vld [vmem:[%s258 + $0x98] sm:$0xff]
        %v287 = vld [vmem:[%s258 + $0xa0] sm:$0xff]
        %v288 = vld [vmem:[%s258 + $0xa8] sm:$0xff]
        %v289 = vld [vmem:[%s258 + $0xb0] sm:$0xff]
        %v290 = vld [vmem:[%s258 + $0xb8] sm:$0xff]
        %v291 = vld [vmem:[%s258 + $0xc0] sm:$0xff]
        %v292 = vld [vmem:[%s258 + $0xc8] sm:$0xff]
        %v293 = vld [vmem:[%s258 + $0xd0] sm:$0xff]
        %v294 = vld [vmem:[%s258 + $0xd8] sm:$0xff]
        %v295 = vld [vmem:[%s258 + $0xe0] sm:$0xff]
        %v296 = vld [vmem:[%s258 + $0xe8] sm:$0xff]
        %v297 = vld [vmem:[%s258 + $0xf0] sm:$0xff]
        %v298 = vld [vmem:[%s258 + $0xf8] sm:$0xff]
        %v299 = vld [vmem:[#allocation2] sm:$0x1]
        %vm300 = vcmask 64512
        %v301 = vsel %vm300, %v267, 0.0
        %v302 = vsel %vm300, %v268, 0.0
        %v303 = vadd.f32 %v301, %v302
        %v304 = vsel %vm300, %v269, 0.0
        %v305 = vadd.f32 %v303, %v304
        %v306 = vsel %vm300, %v270, 0.0
        %v307 = vadd.f32 %v305, %v306
        %v308 = vsel %vm300, %v271, 0.0
        %v309 = vadd.f32 %v307, %v308
        %v310 = vsel %vm300, %v272, 0.0
        %v311 = vadd.f32 %v309, %v310
        %v312 = vsel %vm300, %v273, 0.0
        %v313 = vadd.f32 %v311, %v312
        %v314 = vsel %vm300, %v274, 0.0
        %v315 = vadd.f32 %v313, %v314
        %v316 = vsel %vm300, %v275, 0.0
        %v317 = vadd.f32 %v315, %v316
        %v318 = vsel %vm300, %v276, 0.0
        %v319 = vadd.f32 %v317, %v318
        %v320 = vsel %vm300, %v277, 0.0
        %v321 = vadd.f32 %v319, %v320
        %v322 = vsel %vm300, %v278, 0.0
        %v323 = vadd.f32 %v321, %v322
        %v324 = vsel %vm300, %v279, 0.0
        %v325 = vadd.f32 %v323, %v324
        %v326 = vsel %vm300, %v280, 0.0
        %v327 = vadd.f32 %v325, %v326
        %v328 = vsel %vm300, %v281, 0.0
        %v329 = vadd.f32 %v327, %v328
        %v330 = vsel %vm300, %v282, 0.0
        %v331 = vadd.f32 %v329, %v330
        %v332 = vsel %vm300, %v283, 0.0
        %v333 = vadd.f32 %v331, %v332
        %v334 = vsel %vm300, %v284, 0.0
        %v335 = vadd.f32 %v333, %v334
        %v336 = vsel %vm300, %v285, 0.0
        %v337 = vadd.f32 %v335, %v336
        %v338 = vsel %vm300, %v286, 0.0
        %v339 = vadd.f32 %v337, %v338
        %v340 = vsel %vm300, %v287, 0.0
        %v341 = vadd.f32 %v339, %v340
        %v342 = vsel %vm300, %v288, 0.0
        %v343 = vadd.f32 %v341, %v342
        %v344 = vsel %vm300, %v289, 0.0
        %v345 = vadd.f32 %v343, %v344
        %v346 = vsel %vm300, %v290, 0.0
        %v347 = vadd.f32 %v345, %v346
        %v348 = vsel %vm300, %v291, 0.0
        %v349 = vadd.f32 %v347, %v348
        %v350 = vsel %vm300, %v292, 0.0
        %v351 = vadd.f32 %v349, %v350
        %v352 = vsel %vm300, %v293, 0.0
        %v353 = vadd.f32 %v351, %v352
        %v354 = vsel %vm300, %v294, 0.0
        %v355 = vadd.f32 %v353, %v354
        %v356 = vsel %vm300, %v295, 0.0
        %v357 = vadd.f32 %v355, %v356
        %v358 = vsel %vm300, %v296, 0.0
        %v359 = vadd.f32 %v357, %v358
        %v360 = vsel %vm300, %v297, 0.0
        %v361 = vadd.f32 %v359, %v360
        %v362 = vsel %vm300, %v298, 0.0
        %v363 = vadd.f32 %v361, %v362
        %v364 = vrot.slane %v363, 4
        %v365 = vadd.f32 %v363, %v364
        %v366 = vrot.slane %v365, 2
        %v367 = vadd.f32 %v365, %v366
        %v368 = vrot.slane %v367, 1
        %v369 = vadd.f32 %v367, %v368
        %v370 = vadd.f32 %v299, %v369
        %vm371 = vcmask 57344
        %372 = vst.msk [vmem:[#allocation2] sm:$0x1] %vm371, %v370
        %v373 = vld [vmem:[#allocation3] sm:$0x1]
        %v374 = vmul.f32 %v267, %v267
        %v375 = vmul.f32 %v268, %v268
        %v376 = vmul.f32 %v269, %v269
        %v377 = vmul.f32 %v270, %v270
        %v378 = vmul.f32 %v271, %v271
        %v379 = vmul.f32 %v272, %v272
        %v380 = vmul.f32 %v273, %v273
        %v381 = vmul.f32 %v274, %v274
        %v382 = vmul.f32 %v275, %v275
        %v383 = vmul.f32 %v276, %v276
        %v384 = vmul.f32 %v277, %v277
        %v385 = vmul.f32 %v278, %v278
        %v386 = vmul.f32 %v279, %v279
        %v387 = vmul.f32 %v280, %v280
        %v388 = vmul.f32 %v281, %v281
        %v389 = vmul.f32 %v282, %v282
        %v390 = vmul.f32 %v283, %v283
        %v391 = vmul.f32 %v284, %v284
        %v392 = vmul.f32 %v285, %v285
        %v393 = vmul.f32 %v286, %v286
        %v394 = vmul.f32 %v287, %v287
        %v395 = vmul.f32 %v288, %v288
        %v396 = vmul.f32 %v289, %v289
        %v397 = vmul.f32 %v290, %v290
        %v398 = vmul.f32 %v291, %v291
        %v399 = vmul.f32 %v292, %v292
        %v400 = vmul.f32 %v293, %v293
        %v401 = vmul.f32 %v294, %v294
        %v402 = vmul.f32 %v295, %v295
        %v403 = vmul.f32 %v296, %v296
        %v404 = vmul.f32 %v297, %v297
        %v405 = vmul.f32 %v298, %v298
        %v406 = vsel %vm300, %v374, 0.0
        %v407 = vsel %vm300, %v375, 0.0
        %v408 = vadd.f32 %v406, %v407
        %v409 = vsel %vm300, %v376, 0.0
        %v410 = vadd.f32 %v408, %v409
        %v411 = vsel %vm300, %v377, 0.0
        %v412 = vadd.f32 %v410, %v411
        %v413 = vsel %vm300, %v378, 0.0
        %v414 = vadd.f32 %v412, %v413
        %v415 = vsel %vm300, %v379, 0.0
        %v416 = vadd.f32 %v414, %v415
        %v417 = vsel %vm300, %v380, 0.0
        %v418 = vadd.f32 %v416, %v417
        %v419 = vsel %vm300, %v381, 0.0
        %v420 = vadd.f32 %v418, %v419
        %v421 = vsel %vm300, %v382, 0.0
        %v422 = vadd.f32 %v420, %v421
        %v423 = vsel %vm300, %v383, 0.0
        %v424 = vadd.f32 %v422, %v423
        %v425 = vsel %vm300, %v384, 0.0
        %v426 = vadd.f32 %v424, %v425
        %v427 = vsel %vm300, %v385, 0.0
        %v428 = vadd.f32 %v426, %v427
        %v429 = vsel %vm300, %v386, 0.0
        %v430 = vadd.f32 %v428, %v429
        %v431 = vsel %vm300, %v387, 0.0
        %v432 = vadd.f32 %v430, %v431
        %v433 = vsel %vm300, %v388, 0.0
        %v434 = vadd.f32 %v432, %v433
        %v435 = vsel %vm300, %v389, 0.0
        %v436 = vadd.f32 %v434, %v435
        %v437 = vsel %vm300, %v390, 0.0
        %v438 = vadd.f32 %v436, %v437
        %v439 = vsel %vm300, %v391, 0.0
        %v440 = vadd.f32 %v438, %v439
        %v441 = vsel %vm300, %v392, 0.0
        %v442 = vadd.f32 %v440, %v441
        %v443 = vsel %vm300, %v393, 0.0
        %v444 = vadd.f32 %v442, %v443
        %v445 = vsel %vm300, %v394, 0.0
        %v446 = vadd.f32 %v444, %v445
        %v447 = vsel %vm300, %v395, 0.0
        %v448 = vadd.f32 %v446, %v447
        %v449 = vsel %vm300, %v396, 0.0
        %v450 = vadd.f32 %v448, %v449
        %v451 = vsel %vm300, %v397, 0.0
        %v452 = vadd.f32 %v450, %v451
        %v453 = vsel %vm300, %v398, 0.0
        %v454 = vadd.f32 %v452, %v453
        %v455 = vsel %vm300, %v399, 0.0
        %v456 = vadd.f32 %v454, %v455
        %v457 = vsel %vm300, %v400, 0.0
        %v458 = vadd.f32 %v456, %v457
        %v459 = vsel %vm300, %v401, 0.0
        %v460 = vadd.f32 %v458, %v459
        %v461 = vsel %vm300, %v402, 0.0
        %v462 = vadd.f32 %v460, %v461
        %v463 = vsel %vm300, %v403, 0.0
        %v464 = vadd.f32 %v462, %v463
        %v465 = vsel %vm300, %v404, 0.0
        %v466 = vadd.f32 %v464, %v465
        %v467 = vsel %vm300, %v405, 0.0
        %v468 = vadd.f32 %v466, %v467
        %v469 = vrot.slane %v468, 4
        %v470 = vadd.f32 %v468, %v469
        %v471 = vrot.slane %v470, 2
        %v472 = vadd.f32 %v470, %v471
        %v473 = vrot.slane %v472, 1
        %v474 = vadd.f32 %v472, %v473
        %v475 = vadd.f32 %v373, %v474
        %476 = vst.msk [vmem:[#allocation3] sm:$0x1] %vm371, %v475
        // Predicated region
        $region41: #{tpu_custom_call.1} parent=35 // pred_check
          %p477 = pneg %p260
        $region42: #{tpu_custom_call.1} parent=35 // pred_check_branch
          %479 = sbr.rel (%p477) target = $region44
        $region43: #{tpu_custom_call.1} parent=35 // pred_region
          %v480 = vld [vmem:[#allocation2] sm:$0x1]
          %v481 = vld [vmem:[%s1] sm:$0xff]
          %v483 = vsel %vm300, %v480, 0
          %485 = vmatprep.subr.mxu0 0.0
          %486 = vmatpush1.msra.mxu0 %v481
          %487 = vmatprep.subr.mxu0 0.0
          %488 = vmatpush1.msra.mxu0 0.0
          %489 = vmatprep.subr.mxu0 0.0
          %490 = vmatpush1.msra.mxu0 0.0
          %491 = vmatprep.subr.mxu0 0.0
          %492 = vmatpush1.msra.mxu0 0.0
          %493 = vmatprep.subr.mxu0 0.0
          %494 = vmatpush1.msra.mxu0 0.0
          %495 = vmatprep.subr.mxu0 0.0
          %496 = vmatpush1.msra.mxu0 0.0
          %497 = vmatprep.subr.mxu0 0.0
          %498 = vmatpush1.msra.mxu0 0.0
          %499 = vmatprep.subr.mxu0 0.0
          %500 = vmatpush1.msra.mxu0 0.0
          %501 = vmatprep.subr.mxu0 0.0
          %502 = vmatpush1.msra.mxu0 0.0
          %503 = vmatprep.subr.mxu0 0.0
          %504 = vmatpush1.msra.mxu0 0.0
          %505 = vmatprep.subr.mxu0 0.0
          %506 = vmatpush1.msra.mxu0 0.0
          %507 = vmatprep.subr.mxu0 0.0
          %508 = vmatpush1.msra.mxu0 0.0
          %509 = vmatprep.subr.mxu0 0.0
          %510 = vmatpush1.msra.mxu0 0.0
          %511 = vmatprep.subr.mxu0 0.0
          %512 = vmatpush1.msra.mxu0 0.0
          %513 = vmatprep.subr.mxu0 0.0
          %514 = vmatpush1.msra.mxu0 0.0
          %515 = vmatprep.subr.mxu0 0.0
          %516 = vmatpush1.msra.mxu0 0.0
          %517 = vmatprep.subr.mxu0 0.0
          %518 = vmatpush1.msra.mxu0 0.0
          %519 = vmatprep.subr.mxu0 0.0
          %520 = vmatpush1.msra.mxu0 0.0
          %521 = vmatprep.subr.mxu0 0.0
          %522 = vmatpush1.msra.mxu0 0.0
          %523 = vmatprep.subr.mxu0 0.0
          %524 = vmatpush1.msra.mxu0 0.0
          %525 = vmatprep.subr.mxu0 0.0
          %526 = vmatpush1.msra.mxu0 0.0
          %527 = vmatprep.subr.mxu0 0.0
          %528 = vmatpush1.msra.mxu0 0.0
          %529 = vmatprep.subr.mxu0 0.0
          %530 = vmatpush1.msra.mxu0 0.0
          %531 = vmatprep.subr.mxu0 0.0
          %532 = vmatpush1.msra.mxu0 0.0
          %533 = vmatprep.subr.mxu0 0.0
          %534 = vmatpush1.msra.mxu0 0.0
          %535 = vmatprep.subr.mxu0 0.0
          %536 = vmatpush1.msra.mxu0 0.0
          %537 = vmatprep.subr.mxu0 0.0
          %538 = vmatpush1.msra.mxu0 0.0
          %539 = vmatprep.subr.mxu0 0.0
          %540 = vmatpush1.msra.mxu0 0.0
          %541 = vmatprep.subr.mxu0 0.0
          %542 = vmatpush1.msra.mxu0 0.0
          %543 = vmatprep.subr.mxu0 0.0
          %544 = vmatpush1.msra.mxu0 0.0
          %545 = vmatprep.subr.mxu0 0.0
          %546 = vmatpush1.msra.mxu0 0.0
          %547 = vmatprep.subr.mxu0 0.0
          %548 = vmatpush1.msra.mxu0 0.0
          %549 = vmatprep.mubr.f32.mxu0 0.0
          %550 = vmatmul.mubr.f32.gmra.mrb[0].mxu0 %v483
          %v551 = vpop.f32.mrb[0].mxu0
          %v552 = vadd.f32 0.0, %v551
          %v553 = vpop.f32.mrb[0].mxu0
          %554 = vdwg.mxu0
          %v555 = vld [vmem:[#allocation3] sm:$0x1]
          %v557 = vsel %vm300, %v555, 0
          %559 = vmatprep.subr.mxu0 0.0
          %560 = vmatpush1.msra.mxu0 %v481
          %561 = vmatprep.subr.mxu0 0.0
          %562 = vmatpush1.msra.mxu0 0.0
          %563 = vmatprep.subr.mxu0 0.0
          %564 = vmatpush1.msra.mxu0 0.0
          %565 = vmatprep.subr.mxu0 0.0
          %566 = vmatpush1.msra.mxu0 0.0
          %567 = vmatprep.subr.mxu0 0.0
          %568 = vmatpush1.msra.mxu0 0.0
          %569 = vmatprep.subr.mxu0 0.0
          %570 = vmatpush1.msra.mxu0 0.0
          %571 = vmatprep.subr.mxu0 0.0
          %572 = vmatpush1.msra.mxu0 0.0
          %573 = vmatprep.subr.mxu0 0.0
          %574 = vmatpush1.msra.mxu0 0.0
          %575 = vmatprep.subr.mxu0 0.0
          %576 = vmatpush1.msra.mxu0 0.0
          %577 = vmatprep.subr.mxu0 0.0
          %578 = vmatpush1.msra.mxu0 0.0
          %579 = vmatprep.subr.mxu0 0.0
          %580 = vmatpush1.msra.mxu0 0.0
          %581 = vmatprep.subr.mxu0 0.0
          %582 = vmatpush1.msra.mxu0 0.0
          %583 = vmatprep.subr.mxu0 0.0
          %584 = vmatpush1.msra.mxu0 0.0
          %585 = vmatprep.subr.mxu0 0.0
          %586 = vmatpush1.msra.mxu0 0.0
          %587 = vmatprep.subr.mxu0 0.0
          %588 = vmatpush1.msra.mxu0 0.0
          %589 = vmatprep.subr.mxu0 0.0
          %590 = vmatpush1.msra.mxu0 0.0
          %591 = vmatprep.subr.mxu0 0.0
          %592 = vmatpush1.msra.mxu0 0.0
          %593 = vmatprep.subr.mxu0 0.0
          %594 = vmatpush1.msra.mxu0 0.0
          %595 = vmatprep.subr.mxu0 0.0
          %596 = vmatpush1.msra.mxu0 0.0
          %597 = vmatprep.subr.mxu0 0.0
          %598 = vmatpush1.msra.mxu0 0.0
          %599 = vmatprep.subr.mxu0 0.0
          %600 = vmatpush1.msra.mxu0 0.0
          %601 = vmatprep.subr.mxu0 0.0
          %602 = vmatpush1.msra.mxu0 0.0
          %603 = vmatprep.subr.mxu0 0.0
          %604 = vmatpush1.msra.mxu0 0.0
          %605 = vmatprep.subr.mxu0 0.0
          %606 = vmatpush1.msra.mxu0 0.0
          %607 = vmatprep.subr.mxu0 0.0
          %608 = vmatpush1.msra.mxu0 0.0
          %609 = vmatprep.subr.mxu0 0.0
          %610 = vmatpush1.msra.mxu0 0.0
          %611 = vmatprep.subr.mxu0 0.0
          %612 = vmatpush1.msra.mxu0 0.0
          %613 = vmatprep.subr.mxu0 0.0
          %614 = vmatpush1.msra.mxu0 0.0
          %615 = vmatprep.subr.mxu0 0.0
          %616 = vmatpush1.msra.mxu0 0.0
          %617 = vmatprep.subr.mxu0 0.0
          %618 = vmatpush1.msra.mxu0 0.0
          %619 = vmatprep.subr.mxu0 0.0
          %620 = vmatpush1.msra.mxu0 0.0
          %621 = vmatprep.subr.mxu0 0.0
          %622 = vmatpush1.msra.mxu0 0.0
          %623 = vmatprep.mubr.f32.mxu0 0.0
          %624 = vmatmul.mubr.f32.gmra.mrb[0].mxu0 %v557
          %v625 = vpop.f32.mrb[0].mxu0
          %v626 = vadd.f32 0.0, %v625
          %v627 = vpop.f32.mrb[0].mxu0
          %628 = vdwg.mxu0
          %v629 = vmul.f32 %v552, %v552
          %v630 = vsub.f32 %v626, %v629
          %v631 = vadd.f32 %v630, 1e-05
          %v632 = vrsqrt.pop %v631
          %v633 = vld [vmem:[%s2] sm:$0x1]
          %v634 = vmul.f32 %v633, %v632
          %635 = vst.msk [vmem:[%s243] sm:$0x1] %vm371, %v634
          %v636 = vld [vmem:[%s3] sm:$0x1]
          %v637 = vmul.f32 %v552, %v633
          %v638 = vmul.f32 %v637, %v632
          %v639 = vsub.f32 %v636, %v638
          %640 = vst.msk [vmem:[%s249] sm:$0x1] %vm371, %v639
        $region44: #{tpu_custom_call.1} parent=35 // pred_fallthru
          _
        %s641 = sand.u32 %s134, 1
        %s642 = scalar_lea.sflag [#allocation5], %s641
        %s643 = sand.u32 %s134, 1
        %s644 = scalar_lea.vmem [#allocation4], %s643
        %s645 = sand.u32 %s160, 1
        %s646 = scalar_lea.sflag [#allocation7], %s645
        %s647 = sand.u32 %s160, 1
        %s648 = scalar_lea.vmem [#allocation6], %s647
        // Predicated region
        $region45: #{tpu_custom_call.1} parent=35 // pred_check
          %p649 = pneg %p144
        $region46: #{tpu_custom_call.1} parent=35 // pred_check_branch
          %651 = sbr.rel (%p649) target = $region48
        $region47: #{tpu_custom_call.1} parent=35 // pred_region
          %s653 = ssub.s32 16, 16
          %654 = vsyncadd %s642, %s653
          %s655 = smul.addr %s27, 16
          %s656 = scalar_lea.hbm %s4, %s655
          %s658 = sshll.u32 %s644, 4
          %s659 = int_to_ptr.vmem [resolvable:$true] %s658
          %661 = dma.vmem_to_hbm [thread:$0]  %s659, 16, %s656, %s642
        $region48: #{tpu_custom_call.1} parent=35 // pred_fallthru
          _
        // Predicated region
        $region49: #{tpu_custom_call.1} parent=35 // pred_check
          %p662 = pneg %p170
        $region50: #{tpu_custom_call.1} parent=35 // pred_check_branch
          %664 = sbr.rel (%p662) target = $region52
        $region51: #{tpu_custom_call.1} parent=35 // pred_region
          %s666 = ssub.s32 16, 16
          %667 = vsyncadd %s646, %s666
          %s668 = smul.addr %s27, 16
          %s669 = scalar_lea.hbm %s5, %s668
          %s671 = sshll.u32 %s648, 4
          %s672 = int_to_ptr.vmem [resolvable:$true] %s671
          %674 = dma.vmem_to_hbm [thread:$0]  %s672, 16, %s669, %s646
        $region52: #{tpu_custom_call.1} parent=35 // pred_fallthru
          _
      $region36: #{tpu_custom_call.1} parent=5 // pred_fallthru
        _
      %p675 = scmp.le.s32.totalorder 2, %s18
      // Predicated region
      $region53: #{tpu_custom_call.1} parent=5 // pred_check
        %p676 = pneg %p675
      $region54: #{tpu_custom_call.1} parent=5 // pred_check_branch
        %678 = sbr.rel (%p676) target = $region56
      $region55: #{tpu_custom_call.1} parent=5 // pred_region
        %s679 = ssub.s32 %s18, 2
        // Predicated region
        $region57: #{tpu_custom_call.1} parent=55 // pred_check
          %p680 = pneg %p150
        $region58: #{tpu_custom_call.1} parent=55 // pred_check_branch
          %682 = sbr.rel (%p680) target = $region60
        $region59: #{tpu_custom_call.1} parent=55 // pred_region
          %s683 = sand.u32 %s135, 1
          %s684 = scalar_lea.sflag [#allocation5], %s683
          %s685 = sand.u32 %s135, 1
          %s686 = scalar_lea.vmem [#allocation4], %s685
          %687 = dma.done %s684, 16
        $region60: #{tpu_custom_call.1} parent=55 // pred_fallthru
          _
        // Predicated region
        $region61: #{tpu_custom_call.1} parent=55 // pred_check
          %p688 = pneg %p176
        $region62: #{tpu_custom_call.1} parent=55 // pred_check_branch
          %690 = sbr.rel (%p688) target = $region64
        $region63: #{tpu_custom_call.1} parent=55 // pred_region
          %s691 = sand.u32 %s161, 1
          %s692 = scalar_lea.sflag [#allocation7], %s691
          %s693 = sand.u32 %s161, 1
          %s694 = scalar_lea.vmem [#allocation6], %s693
          %695 = dma.done %s692, 16
        $region64: #{tpu_custom_call.1} parent=55 // pred_fallthru
          _
      $region56: #{tpu_custom_call.1} parent=5 // pred_fallthru
        _
    $region6: #{tpu_custom_call.1} parent=1 // loop_footer
      %s22 = sadd.s32 1, %s18
    $region7: #{tpu_custom_call.1} parent=1 // loop_footer_branch
      %17 = sbr.rel target = $region3
    $region8: #{tpu_custom_call.1} parent=1 // loop_exit
      _
    %696 = vsyncpa [#allocation5], 1
    %s697 = scalar_lea.sflag [#allocation5], 1
    %698 = vsyncpa %s697, 1
    %699 = vsyncpa [#allocation7], 1
    %s700 = scalar_lea.sflag [#allocation7], 1
    %701 = vsyncpa %s700, 1

</llo_original>
